<compile_context>
chip_gen: v5e
topology: v5e:2x2
jax: 0.10.0
libtpu: 0.0.40
codegen_flags: <defaults>
</compile_context>

<pallas_src>
import functools

import numpy as np
import jax
import jax.numpy as jnp
from jax import lax
from jax.experimental import pallas as pl
from jax.experimental.pallas import tpu as pltpu

_LAMBDA_WI = 0.5
# distance_kernel_x2 = [sqrt2, 1, sqrt2, sqrt2, 1, sqrt2]
_D_DIAG = float(np.exp(-_LAMBDA_WI * np.sqrt(2.0)))   # 4 corner taps
_D_MID = float(np.exp(-_LAMBDA_WI * 1.0))             # 2 centre taps
_DIST_FACTOR = np.exp(-_LAMBDA_WI * np.array(
    [np.sqrt(2.0), 1.0, np.sqrt(2.0), np.sqrt(2.0), 1.0, np.sqrt(2.0)],
    dtype=np.float32)).astype(np.float32)              # used by the reference


def _upsample2x_kernel(gmin_ref, x_ref, o_ref, *, H, W):
    """gmin_ref: SMEM (1,1) f32.  x_ref: VMEM (Bb, H*W) lane-dense flat image.
    o_ref: VMEM (Bb, 2*H*W); row-major (B, 2*H*W) == (B, 2H, W), so lane
    segment [2i*W, (2i+1)*W) is output row 2i (= x row i) and
    [(2i+1)*W, (2i+2)*W) is output row 2i+1 (= interpolated row i)."""
    HW = H * W
    x = x_ref[...]                               # (Bb, H*W) f32
    gmin = gmin_ref[0, 0]

    # Hoisted per-element weight t and value*weight p (computed once per input
    # element instead of once per window tap).  Exact exp / divide form kept on
    # purpose so overflow (-> weight exactly 0 -> den==0 fallback) matches the
    # PyTorch reference; the kernel is HBM/store bound, not VALU/EUP bound.
    t = 2.0 / (1.0 + jnp.exp(x - gmin))
    t = jnp.where(x == 0.0, 0.0, t)              # nonzero mask, no convert+mul
    p = x * t

    # Column (within-row) neighbours.  Masks come from a single (1, H*W) iota
    # broadcast over the batch sublanes.  The flat lane-roll wraps across
    # W-row boundaries, but exactly those positions are the zero column
    # padding of F.unfold(padding=(0, 1)) and are masked to 0.
    col = lax.broadcasted_iota(jnp.int32, (1, HW), 1) % W
    not_first = col != 0
    not_last = col != (W - 1)
    t_l = jnp.where(not_first, jnp.roll(t, 1, axis=1), 0.0)
    p_l = jnp.where(not_first, jnp.roll(p, 1, axis=1), 0.0)
    t_r = jnp.where(not_last, jnp.roll(t, -1, axis=1), 0.0)
    p_r = jnp.where(not_last, jnp.roll(p, -1, axis=1), 0.0)

    # Per-input-row contribution to the 2x3 window sums (distance factors are
    # equal within the corner group and within the centre group).
    numf = _D_DIAG * (p_l + p_r) + _D_MID * p            # (Bb, H*W)
    denf = _D_DIAG * (t_l + t_r) + _D_MID * t

    # A window spans input rows (i, i+1): add the next row's contribution with
    # a lane-roll by -W (no sublane-offset slices).  The last W lanes wrap
    # around and are garbage, but that row's interpolation is never used.
    num = numf + jnp.roll(numf, -W, axis=1)
    den = denf + jnp.roll(denf, -W, axis=1)
    den = jnp.where(den == 0.0, 1.0, den)
    pix = num / den                                      # (Bb, H*W)

    # Interleave x rows and interpolated rows at W granularity along lanes:
    # one (Bb, 2W) store per output row-pair.  The last pair repeats the last
    # input row (the torch.dstack of x[:, :, -1:, :]).
    x = x.astype(o_ref.dtype)
    pix = pix.astype(o_ref.dtype)
    for i in range(H - 1):
        o_ref[:, 2 * i * W:(2 * i + 2) * W] = jnp.concatenate(
            [x[:, i * W:(i + 1) * W], pix[:, i * W:(i + 1) * W]], axis=1)
    last = x[:, (H - 1) * W:]
    o_ref[:, (2 * H - 2) * W:] = jnp.concatenate([last, last], axis=1)


def _pick_batch_block(B, H, W, target_bytes=6 << 20):
    """Images per grid step.  The (Bb, H*W) block's second-minor dim must be a
    multiple of 8 (sublane tile) or equal to B (block-shape rule + dense
    sublanes).  Size targets ~target_bytes of f32 in+out per block (big enough
    to amortize per-step overhead on v6e, small enough for v7x's scoped VMEM),
    keeps >= 2 grid steps when B allows, and prefers an even grid length so
    "parallel" keeps both v7x TensorCores balanced."""
    if B <= 8:
        return B                                  # single full-batch block
    per_image = 3 * H * W * 4                     # f32: H*W in + 2*H*W out
    cap = min(int(target_bytes // per_image), B // 2)
    bb = max(8, (cap // 8) * 8)
    g = -(-B // bb)
    if g >= 3 and g % 2:                          # try for an even step count
        for cand in range(bb - 8, max(7, bb - 64), -8):
            if (-(-B // cand)) % 2 == 0:
                bb = cand
                break
    return bb


def upsample2x(x, out_dtype=jnp.float32):
    """Upsampling_Conv(upsampling_factor=2) forward: (B,1,H,W) -> (B,1,2H,W)."""
    B, C, H, W = x.shape
    assert C == 1, "Upsampling_Conv is defined with n_channels=1"
    assert H >= 2, "need at least two rows to interpolate between"

    # Lane-dense flat view (free, row-major): lane axis = H*W instead of W.
    xs = x.reshape(B, H * W).astype(jnp.float32)

    # torch.min(unfolded windows) spans the whole batch and includes the zero
    # column padding  ==>  gmin = min(x.min(), 0).  Inherent extra HBM read of
    # x; kept as a tiny XLA reduction passed to the kernel via SMEM.
    gmin = jnp.minimum(jnp.min(xs), 0.0).reshape(1, 1).astype(jnp.float32)

    Bb = _pick_batch_block(B, H, W)
    grid = (pl.cdiv(B, Bb),)                      # partial last block is fine:
    # garbage batch rows never mix with real ones (all rolls are lane-only)
    # and their output writes are clipped by Pallas.
    kernel = functools.partial(_upsample2x_kernel, H=H, W=W)
    out = pl.pallas_call(
        kernel,
        # Flat (B, 2*H*W) is row-major identical to (B, 2H, W): the reshape
        # below is free and the kernel gets a lane-dense output slab.
        out_shape=jax.ShapeDtypeStruct((B, 2 * H * W), out_dtype),
        grid=grid,
        in_specs=[
            pl.BlockSpec(memory_space=pltpu.MemorySpace.SMEM),    # gmin (1,1)
            pl.BlockSpec((Bb, H * W), lambda b: (b, 0)),
        ],
        out_specs=pl.BlockSpec((Bb, 2 * H * W), lambda b: (b, 0)),
        compiler_params=pltpu.CompilerParams(
            dimension_semantics=("parallel",),
            vmem_limit_bytes=40 * 1024 * 1024),   # v5e default (16 MiB) is low
    )(gmin, xs)
    return out.reshape(B, 1, 2 * H, W)            # back to NCHW, free reshape


def _reference_upsample2x(x):
    """Pure-JAX reference mirroring the PyTorch forward exactly."""
    B, C, H, W = x.shape
    xs = x[:, 0].astype(jnp.float32)
    gmin = jnp.minimum(jnp.min(xs), 0.0)
    pad = jnp.pad(xs, ((0, 0), (0, 0), (1, 1)))
    windows = jnp.stack(
        [pad[:, :-1, 0:W], pad[:, :-1, 1:W + 1], pad[:, :-1, 2:W + 2],
         pad[:, 1:, 0:W], pad[:, 1:, 1:W + 1], pad[:, 1:, 2:W + 2]],
        axis=-1)                                             # (B, H-1, W, 6)
    wi = (jnp.asarray(_DIST_FACTOR)
          * (2.0 / (1.0 + jnp.exp(windows - gmin)))
          * (windows != 0.0).astype(jnp.float32))
    num = (windows * wi).sum(-1)
    den = wi.sum(-1)
    den = jnp.where(den == 0.0, 1.0, den)
    pix = num / den                                          # (B, H-1, W)
    out = jnp.zeros((B, 2 * H, W), jnp.float32)
    out = out.at[:, 0:2 * H:2, :].set(xs)
    out = out.at[:, 1:2 * H - 1:2, :].set(pix)
    out = out.at[:, 2 * H - 1, :].set(xs[:, -1, :])
    return out[:, None, :, :]


if __name__ == "__main__":
    def _check(B, H, W, salt):
        key = jax.random.fold_in(jax.random.PRNGKey(0), salt)
        x = jax.random.normal(key, (B, 1, H, W), dtype=jnp.float32)
        # Exercise the (value == 0) mask and the den==0 fallback paths.
        x = x.at[0, 0, 3, 5].set(0.0)                 # isolated interior zero
        x = x.at[B - 1, 0, 4:6, 6:9].set(0.0)         # all-zero 2x3 window
        y = jax.block_until_ready(upsample2x(x))
        y_ref = _reference_upsample2x(x)
        assert y.shape == (B, 1, 2 * H, W)
        np.testing.assert_allclose(np.asarray(y), np.asarray(y_ref),
                                   rtol=1e-5, atol=1e-5)

    _check(2, 16, 16, salt=0)     # tiny batch, single block
    _check(8, 16, 16, salt=1)     # full-sublane block
    _check(13, 16, 16, salt=2)    # Bb=8, cdiv grid with a ragged last block
    _check(3, 12, 20, salt=3)     # H*W not a multiple of 128
    print("KERNEL_OK")
</pallas_src>

<mosaic_0001>
module attributes {stable_mosaic.version = 11 : i64} {
  func.func @_upsample2x_kernel(%arg0: i32, %arg1: memref<1x1xf32, #tpu.memory_space<smem>>, %arg2: memref<2x256xf32, #tpu.memory_space<vmem>>, %arg3: memref<2x512xf32, #tpu.memory_space<vmem>>) attributes {dimension_semantics = [#tpu.dimension_semantics<parallel>], iteration_bounds = array<i64: 1>, scalar_prefetch = 0 : i64, scratch_operands = 0 : i64, tpu.core_type = #tpu.core_type<tc>, window_params = [{transform_indices = @transform_0, window_bounds = array<i64: 1, 1>}, {transform_indices = @transform_1, window_bounds = array<i64: 2, 256>}, {transform_indices = @transform_2, window_bounds = array<i64: 2, 512>}]} {
    %c0 = arith.constant 0 : index
    %c0_0 = arith.constant 0 : index
    %0 = vector.load %arg2[%c0, %c0_0] : memref<2x256xf32, #tpu.memory_space<vmem>>, vector<2x256xf32>
    %c0_1 = arith.constant 0 : index
    %c0_2 = arith.constant 0 : index
    %1 = memref.load %arg1[%c0_1, %c0_2] : memref<1x1xf32, #tpu.memory_space<smem>>
    %2 = vector.broadcast %1 : f32 to vector<2x256xf32>
    %3 = arith.subf %0, %2 : vector<2x256xf32>
    %4 = math.exp %3 : vector<2x256xf32>
    %cst = arith.constant 1.000000e+00 : f32
    %5 = vector.broadcast %cst : f32 to vector<2x256xf32>
    %6 = arith.addf %5, %4 : vector<2x256xf32>
    %cst_3 = arith.constant 2.000000e+00 : f32
    %7 = vector.broadcast %cst_3 : f32 to vector<2x256xf32>
    %8 = arith.divf %7, %6 : vector<2x256xf32>
    %cst_4 = arith.constant 0.000000e+00 : f32
    %9 = vector.broadcast %cst_4 : f32 to vector<2x256xf32>
    %10 = arith.cmpf oeq, %0, %9 : vector<2x256xf32>
    %cst_5 = arith.constant 0.000000e+00 : f32
    %11 = vector.broadcast %cst_5 : f32 to vector<2x256xf32>
    %12 = arith.select %10, %11, %8 : vector<2x256xi1>, vector<2x256xf32>
    %13 = arith.mulf %0, %12 : vector<2x256xf32>
    %14 = tpu.iota {dimensions = array<i32: 1>} : vector<1x256xi32>
    %c16_i32 = arith.constant 16 : i32
    %c0_i32 = arith.constant 0 : i32
    %15 = arith.cmpi eq, %c16_i32, %c0_i32 : i32
    %c1_i32 = arith.constant 1 : i32
    %16 = arith.select %15, %c1_i32, %c16_i32 : i32
    %17 = vector.broadcast %16 : i32 to vector<1x256xi32>
    %18 = arith.remsi %14, %17 : vector<1x256xi32>
    %c0_i32_6 = arith.constant 0 : i32
    %19 = vector.broadcast %c0_i32_6 : i32 to vector<1x256xi32>
    %20 = arith.cmpi ne, %18, %19 : vector<1x256xi32>
    %c0_i32_7 = arith.constant 0 : i32
    %21 = vector.broadcast %c0_i32_7 : i32 to vector<1x256xi32>
    %22 = arith.cmpi slt, %18, %21 : vector<1x256xi32>
    %c0_i32_8 = arith.constant 0 : i32
    %23 = arith.cmpi slt, %16, %c0_i32_8 : i32
    %24 = vector.broadcast %23 : i1 to vector<1x256xi1>
    %25 = vector.broadcast %24 : vector<1x256xi1> to vector<1x256xi1>
    %26 = arith.xori %22, %25 : vector<1x256xi1>
    %27 = arith.andi %26, %20 : vector<1x256xi1>
    %28 = vector.broadcast %16 : i32 to vector<1x256xi32>
    %29 = arith.addi %18, %28 : vector<1x256xi32>
    %30 = arith.select %27, %29, %18 : vector<1x256xi1>, vector<1x256xi32>
    %c0_i32_9 = arith.constant 0 : i32
    %31 = vector.broadcast %c0_i32_9 : i32 to vector<1x256xi32>
    %32 = arith.cmpi ne, %30, %31 : vector<1x256xi32>
    %c15_i32 = arith.constant 15 : i32
    %33 = vector.broadcast %c15_i32 : i32 to vector<1x256xi32>
    %34 = arith.cmpi ne, %30, %33 : vector<1x256xi32>
    %35 = vector.extract_strided_slice %12 {offsets = [0, 255], sizes = [2, 1], strides = [1, 1]} : vector<2x256xf32> to vector<2x1xf32>
    %36 = vector.extract_strided_slice %12 {offsets = [0, 0], sizes = [2, 255], strides = [1, 1]} : vector<2x256xf32> to vector<2x255xf32>
    %37 = tpu.concatenate %35, %36 in 1 : vector<2x1xf32>, vector<2x255xf32> -> vector<2x256xf32>
    %cst_10 = arith.constant 0.000000e+00 : f32
    %38 = vector.shape_cast %32 : vector<1x256xi1> to vector<1x256xi1>
    %39 = vector.broadcast %38 : vector<1x256xi1> to vector<2x256xi1>
    %40 = vector.broadcast %cst_10 : f32 to vector<2x256xf32>
    %41 = arith.select %39, %37, %40 : vector<2x256xi1>, vector<2x256xf32>
    %42 = vector.extract_strided_slice %13 {offsets = [0, 255], sizes = [2, 1], strides = [1, 1]} : vector<2x256xf32> to vector<2x1xf32>
    %43 = vector.extract_strided_slice %13 {offsets = [0, 0], sizes = [2, 255], strides = [1, 1]} : vector<2x256xf32> to vector<2x255xf32>
    %44 = tpu.concatenate %42, %43 in 1 : vector<2x1xf32>, vector<2x255xf32> -> vector<2x256xf32>
    %cst_11 = arith.constant 0.000000e+00 : f32
    %45 = vector.shape_cast %32 : vector<1x256xi1> to vector<1x256xi1>
    %46 = vector.broadcast %45 : vector<1x256xi1> to vector<2x256xi1>
    %47 = vector.broadcast %cst_11 : f32 to vector<2x256xf32>
    %48 = arith.select %46, %44, %47 : vector<2x256xi1>, vector<2x256xf32>
    %49 = vector.extract_strided_slice %12 {offsets = [0, 1], sizes = [2, 255], strides = [1, 1]} : vector<2x256xf32> to vector<2x255xf32>
    %50 = vector.extract_strided_slice %12 {offsets = [0, 0], sizes = [2, 1], strides = [1, 1]} : vector<2x256xf32> to vector<2x1xf32>
    %51 = tpu.concatenate %49, %50 in 1 : vector<2x255xf32>, vector<2x1xf32> -> vector<2x256xf32>
    %cst_12 = arith.constant 0.000000e+00 : f32
    %52 = vector.shape_cast %34 : vector<1x256xi1> to vector<1x256xi1>
    %53 = vector.broadcast %52 : vector<1x256xi1> to vector<2x256xi1>
    %54 = vector.broadcast %cst_12 : f32 to vector<2x256xf32>
    %55 = arith.select %53, %51, %54 : vector<2x256xi1>, vector<2x256xf32>
    %56 = vector.extract_strided_slice %13 {offsets = [0, 1], sizes = [2, 255], strides = [1, 1]} : vector<2x256xf32> to vector<2x255xf32>
    %57 = vector.extract_strided_slice %13 {offsets = [0, 0], sizes = [2, 1], strides = [1, 1]} : vector<2x256xf32> to vector<2x1xf32>
    %58 = tpu.concatenate %56, %57 in 1 : vector<2x255xf32>, vector<2x1xf32> -> vector<2x256xf32>
    %cst_13 = arith.constant 0.000000e+00 : f32
    %59 = vector.shape_cast %34 : vector<1x256xi1> to vector<1x256xi1>
    %60 = vector.broadcast %59 : vector<1x256xi1> to vector<2x256xi1>
    %61 = vector.broadcast %cst_13 : f32 to vector<2x256xf32>
    %62 = arith.select %60, %58, %61 : vector<2x256xi1>, vector<2x256xf32>
    %63 = arith.addf %48, %62 : vector<2x256xf32>
    %cst_14 = arith.constant 0.493068695 : f32
    %64 = vector.broadcast %cst_14 : f32 to vector<2x256xf32>
    %65 = arith.mulf %64, %63 : vector<2x256xf32>
    %cst_15 = arith.constant 0.606530666 : f32
    %66 = vector.broadcast %cst_15 : f32 to vector<2x256xf32>
    %67 = arith.mulf %66, %13 : vector<2x256xf32>
    %68 = arith.addf %65, %67 : vector<2x256xf32>
    %69 = arith.addf %41, %55 : vector<2x256xf32>
    %cst_16 = arith.constant 0.493068695 : f32
    %70 = vector.broadcast %cst_16 : f32 to vector<2x256xf32>
    %71 = arith.mulf %70, %69 : vector<2x256xf32>
    %cst_17 = arith.constant 0.606530666 : f32
    %72 = vector.broadcast %cst_17 : f32 to vector<2x256xf32>
    %73 = arith.mulf %72, %12 : vector<2x256xf32>
    %74 = arith.addf %71, %73 : vector<2x256xf32>
    %75 = vector.extract_strided_slice %68 {offsets = [0, 16], sizes = [2, 240], strides = [1, 1]} : vector<2x256xf32> to vector<2x240xf32>
    %76 = vector.extract_strided_slice %68 {offsets = [0, 0], sizes = [2, 16], strides = [1, 1]} : vector<2x256xf32> to vector<2x16xf32>
    %77 = tpu.concatenate %75, %76 in 1 : vector<2x240xf32>, vector<2x16xf32> -> vector<2x256xf32>
    %78 = arith.addf %68, %77 : vector<2x256xf32>
    %79 = vector.extract_strided_slice %74 {offsets = [0, 16], sizes = [2, 240], strides = [1, 1]} : vector<2x256xf32> to vector<2x240xf32>
    %80 = vector.extract_strided_slice %74 {offsets = [0, 0], sizes = [2, 16], strides = [1, 1]} : vector<2x256xf32> to vector<2x16xf32>
    %81 = tpu.concatenate %79, %80 in 1 : vector<2x240xf32>, vector<2x16xf32> -> vector<2x256xf32>
    %82 = arith.addf %74, %81 : vector<2x256xf32>
    %cst_18 = arith.constant 0.000000e+00 : f32
    %83 = vector.broadcast %cst_18 : f32 to vector<2x256xf32>
    %84 = arith.cmpf oeq, %82, %83 : vector<2x256xf32>
    %cst_19 = arith.constant 1.000000e+00 : f32
    %85 = vector.broadcast %cst_19 : f32 to vector<2x256xf32>
    %86 = arith.select %84, %85, %82 : vector<2x256xi1>, vector<2x256xf32>
    %87 = arith.divf %78, %86 : vector<2x256xf32>
    %88 = vector.extract_strided_slice %0 {offsets = [0, 0], sizes = [2, 16], strides = [1, 1]} : vector<2x256xf32> to vector<2x16xf32>
    %89 = vector.extract_strided_slice %87 {offsets = [0, 0], sizes = [2, 16], strides = [1, 1]} : vector<2x256xf32> to vector<2x16xf32>
    %90 = tpu.concatenate %88, %89 in 1 : vector<2x16xf32>, vector<2x16xf32> -> vector<2x32xf32>
    %c0_20 = arith.constant 0 : index
    %c0_21 = arith.constant 0 : index
    %91 = vector.load %arg3[%c0_20, %c0_21] : memref<2x512xf32, #tpu.memory_space<vmem>>, vector<2x32xf32>
    tpu.vector_store %arg3[%c0_20, %c0_21], %90 {strides = array<i32>} : memref<2x512xf32, #tpu.memory_space<vmem>>, vector<2x32xf32>,
    %92 = vector.extract_strided_slice %0 {offsets = [0, 16], sizes = [2, 16], strides = [1, 1]} : vector<2x256xf32> to vector<2x16xf32>
    %93 = vector.extract_strided_slice %87 {offsets = [0, 16], sizes = [2, 16], strides = [1, 1]} : vector<2x256xf32> to vector<2x16xf32>
    %94 = tpu.concatenate %92, %93 in 1 : vector<2x16xf32>, vector<2x16xf32> -> vector<2x32xf32>
    %c0_22 = arith.constant 0 : index
    %c32 = arith.constant 32 : index
    %95 = vector.load %arg3[%c0_22, %c32] : memref<2x512xf32, #tpu.memory_space<vmem>>, vector<2x32xf32>
    tpu.vector_store %arg3[%c0_22, %c32], %94 {strides = array<i32>} : memref<2x512xf32, #tpu.memory_space<vmem>>, vector<2x32xf32>,
    %96 = vector.extract_strided_slice %0 {offsets = [0, 32], sizes = [2, 16], strides = [1, 1]} : vector<2x256xf32> to vector<2x16xf32>
    %97 = vector.extract_strided_slice %87 {offsets = [0, 32], sizes = [2, 16], strides = [1, 1]} : vector<2x256xf32> to vector<2x16xf32>
    %98 = tpu.concatenate %96, %97 in 1 : vector<2x16xf32>, vector<2x16xf32> -> vector<2x32xf32>
    %c0_23 = arith.constant 0 : index
    %c64 = arith.constant 64 : index
    %99 = vector.load %arg3[%c0_23, %c64] : memref<2x512xf32, #tpu.memory_space<vmem>>, vector<2x32xf32>
    tpu.vector_store %arg3[%c0_23, %c64], %98 {strides = array<i32>} : memref<2x512xf32, #tpu.memory_space<vmem>>, vector<2x32xf32>,
    %100 = vector.extract_strided_slice %0 {offsets = [0, 48], sizes = [2, 16], strides = [1, 1]} : vector<2x256xf32> to vector<2x16xf32>
    %101 = vector.extract_strided_slice %87 {offsets = [0, 48], sizes = [2, 16], strides = [1, 1]} : vector<2x256xf32> to vector<2x16xf32>
    %102 = tpu.concatenate %100, %101 in 1 : vector<2x16xf32>, vector<2x16xf32> -> vector<2x32xf32>
    %c0_24 = arith.constant 0 : index
    %c96 = arith.constant 96 : index
    %103 = vector.load %arg3[%c0_24, %c96] : memref<2x512xf32, #tpu.memory_space<vmem>>, vector<2x32xf32>
    tpu.vector_store %arg3[%c0_24, %c96], %102 {strides = array<i32>} : memref<2x512xf32, #tpu.memory_space<vmem>>, vector<2x32xf32>,
    %104 = vector.extract_strided_slice %0 {offsets = [0, 64], sizes = [2, 16], strides = [1, 1]} : vector<2x256xf32> to vector<2x16xf32>
    %105 = vector.extract_strided_slice %87 {offsets = [0, 64], sizes = [2, 16], strides = [1, 1]} : vector<2x256xf32> to vector<2x16xf32>
    %106 = tpu.concatenate %104, %105 in 1 : vector<2x16xf32>, vector<2x16xf32> -> vector<2x32xf32>
    %c0_25 = arith.constant 0 : index
    %c128 = arith.constant 128 : index
    %107 = vector.load %arg3[%c0_25, %c128] : memref<2x512xf32, #tpu.memory_space<vmem>>, vector<2x32xf32>
    tpu.vector_store %arg3[%c0_25, %c128], %106 {strides = array<i32>} : memref<2x512xf32, #tpu.memory_space<vmem>>, vector<2x32xf32>,
    %108 = vector.extract_strided_slice %0 {offsets = [0, 80], sizes = [2, 16], strides = [1, 1]} : vector<2x256xf32> to vector<2x16xf32>
    %109 = vector.extract_strided_slice %87 {offsets = [0, 80], sizes = [2, 16], strides = [1, 1]} : vector<2x256xf32> to vector<2x16xf32>
    %110 = tpu.concatenate %108, %109 in 1 : vector<2x16xf32>, vector<2x16xf32> -> vector<2x32xf32>
    %c0_26 = arith.constant 0 : index
    %c160 = arith.constant 160 : index
    %111 = vector.load %arg3[%c0_26, %c160] : memref<2x512xf32, #tpu.memory_space<vmem>>, vector<2x32xf32>
    tpu.vector_store %arg3[%c0_26, %c160], %110 {strides = array<i32>} : memref<2x512xf32, #tpu.memory_space<vmem>>, vector<2x32xf32>,
    %112 = vector.extract_strided_slice %0 {offsets = [0, 96], sizes = [2, 16], strides = [1, 1]} : vector<2x256xf32> to vector<2x16xf32>
    %113 = vector.extract_strided_slice %87 {offsets = [0, 96], sizes = [2, 16], strides = [1, 1]} : vector<2x256xf32> to vector<2x16xf32>
    %114 = tpu.concatenate %112, %113 in 1 : vector<2x16xf32>, vector<2x16xf32> -> vector<2x32xf32>
    %c0_27 = arith.constant 0 : index
    %c192 = arith.constant 192 : index
    %115 = vector.load %arg3[%c0_27, %c192] : memref<2x512xf32, #tpu.memory_space<vmem>>, vector<2x32xf32>
    tpu.vector_store %arg3[%c0_27, %c192], %114 {strides = array<i32>} : memref<2x512xf32, #tpu.memory_space<vmem>>, vector<2x32xf32>,
    %116 = vector.extract_strided_slice %0 {offsets = [0, 112], sizes = [2, 16], strides = [1, 1]} : vector<2x256xf32> to vector<2x16xf32>
    %117 = vector.extract_strided_slice %87 {offsets = [0, 112], sizes = [2, 16], strides = [1, 1]} : vector<2x256xf32> to vector<2x16xf32>
    %118 = tpu.concatenate %116, %117 in 1 : vector<2x16xf32>, vector<2x16xf32> -> vector<2x32xf32>
    %c0_28 = arith.constant 0 : index
    %c224 = arith.constant 224 : index
    %119 = vector.load %arg3[%c0_28, %c224] : memref<2x512xf32, #tpu.memory_space<vmem>>, vector<2x32xf32>
    tpu.vector_store %arg3[%c0_28, %c224], %118 {strides = array<i32>} : memref<2x512xf32, #tpu.memory_space<vmem>>, vector<2x32xf32>,
    %120 = vector.extract_strided_slice %0 {offsets = [0, 128], sizes = [2, 16], strides = [1, 1]} : vector<2x256xf32> to vector<2x16xf32>
    %121 = vector.extract_strided_slice %87 {offsets = [0, 128], sizes = [2, 16], strides = [1, 1]} : vector<2x256xf32> to vector<2x16xf32>
    %122 = tpu.concatenate %120, %121 in 1 : vector<2x16xf32>, vector<2x16xf32> -> vector<2x32xf32>
    %c0_29 = arith.constant 0 : index
    %c256 = arith.constant 256 : index
    %123 = vector.load %arg3[%c0_29, %c256] : memref<2x512xf32, #tpu.memory_space<vmem>>, vector<2x32xf32>
    tpu.vector_store %arg3[%c0_29, %c256], %122 {strides = array<i32>} : memref<2x512xf32, #tpu.memory_space<vmem>>, vector<2x32xf32>,
    %124 = vector.extract_strided_slice %0 {offsets = [0, 144], sizes = [2, 16], strides = [1, 1]} : vector<2x256xf32> to vector<2x16xf32>
    %125 = vector.extract_strided_slice %87 {offsets = [0, 144], sizes = [2, 16], strides = [1, 1]} : vector<2x256xf32> to vector<2x16xf32>
    %126 = tpu.concatenate %124, %125 in 1 : vector<2x16xf32>, vector<2x16xf32> -> vector<2x32xf32>
    %c0_30 = arith.constant 0 : index
    %c288 = arith.constant 288 : index
    %127 = vector.load %arg3[%c0_30, %c288] : memref<2x512xf32, #tpu.memory_space<vmem>>, vector<2x32xf32>
    tpu.vector_store %arg3[%c0_30, %c288], %126 {strides = array<i32>} : memref<2x512xf32, #tpu.memory_space<vmem>>, vector<2x32xf32>,
    %128 = vector.extract_strided_slice %0 {offsets = [0, 160], sizes = [2, 16], strides = [1, 1]} : vector<2x256xf32> to vector<2x16xf32>
    %129 = vector.extract_strided_slice %87 {offsets = [0, 160], sizes = [2, 16], strides = [1, 1]} : vector<2x256xf32> to vector<2x16xf32>
    %130 = tpu.concatenate %128, %129 in 1 : vector<2x16xf32>, vector<2x16xf32> -> vector<2x32xf32>
    %c0_31 = arith.constant 0 : index
    %c320 = arith.constant 320 : index
    %131 = vector.load %arg3[%c0_31, %c320] : memref<2x512xf32, #tpu.memory_space<vmem>>, vector<2x32xf32>
    tpu.vector_store %arg3[%c0_31, %c320], %130 {strides = array<i32>} : memref<2x512xf32, #tpu.memory_space<vmem>>, vector<2x32xf32>,
    %132 = vector.extract_strided_slice %0 {offsets = [0, 176], sizes = [2, 16], strides = [1, 1]} : vector<2x256xf32> to vector<2x16xf32>
    %133 = vector.extract_strided_slice %87 {offsets = [0, 176], sizes = [2, 16], strides = [1, 1]} : vector<2x256xf32> to vector<2x16xf32>
    %134 = tpu.concatenate %132, %133 in 1 : vector<2x16xf32>, vector<2x16xf32> -> vector<2x32xf32>
    %c0_32 = arith.constant 0 : index
    %c352 = arith.constant 352 : index
    %135 = vector.load %arg3[%c0_32, %c352] : memref<2x512xf32, #tpu.memory_space<vmem>>, vector<2x32xf32>
    tpu.vector_store %arg3[%c0_32, %c352], %134 {strides = array<i32>} : memref<2x512xf32, #tpu.memory_space<vmem>>, vector<2x32xf32>,
    %136 = vector.extract_strided_slice %0 {offsets = [0, 192], sizes = [2, 16], strides = [1, 1]} : vector<2x256xf32> to vector<2x16xf32>
    %137 = vector.extract_strided_slice %87 {offsets = [0, 192], sizes = [2, 16], strides = [1, 1]} : vector<2x256xf32> to vector<2x16xf32>
    %138 = tpu.concatenate %136, %137 in 1 : vector<2x16xf32>, vector<2x16xf32> -> vector<2x32xf32>
    %c0_33 = arith.constant 0 : index
    %c384 = arith.constant 384 : index
    %139 = vector.load %arg3[%c0_33, %c384] : memref<2x512xf32, #tpu.memory_space<vmem>>, vector<2x32xf32>
    tpu.vector_store %arg3[%c0_33, %c384], %138 {strides = array<i32>} : memref<2x512xf32, #tpu.memory_space<vmem>>, vector<2x32xf32>,
    %140 = vector.extract_strided_slice %0 {offsets = [0, 208], sizes = [2, 16], strides = [1, 1]} : vector<2x256xf32> to vector<2x16xf32>
    %141 = vector.extract_strided_slice %87 {offsets = [0, 208], sizes = [2, 16], strides = [1, 1]} : vector<2x256xf32> to vector<2x16xf32>
    %142 = tpu.concatenate %140, %141 in 1 : vector<2x16xf32>, vector<2x16xf32> -> vector<2x32xf32>
    %c0_34 = arith.constant 0 : index
    %c416 = arith.constant 416 : index
    %143 = vector.load %arg3[%c0_34, %c416] : memref<2x512xf32, #tpu.memory_space<vmem>>, vector<2x32xf32>
    tpu.vector_store %arg3[%c0_34, %c416], %142 {strides = array<i32>} : memref<2x512xf32, #tpu.memory_space<vmem>>, vector<2x32xf32>,
    %144 = vector.extract_strided_slice %0 {offsets = [0, 224], sizes = [2, 16], strides = [1, 1]} : vector<2x256xf32> to vector<2x16xf32>
    %145 = vector.extract_strided_slice %87 {offsets = [0, 224], sizes = [2, 16], strides = [1, 1]} : vector<2x256xf32> to vector<2x16xf32>
    %146 = tpu.concatenate %144, %145 in 1 : vector<2x16xf32>, vector<2x16xf32> -> vector<2x32xf32>
    %c0_35 = arith.constant 0 : index
    %c448 = arith.constant 448 : index
    %147 = vector.load %arg3[%c0_35, %c448] : memref<2x512xf32, #tpu.memory_space<vmem>>, vector<2x32xf32>
    tpu.vector_store %arg3[%c0_35, %c448], %146 {strides = array<i32>} : memref<2x512xf32, #tpu.memory_space<vmem>>, vector<2x32xf32>,
    %148 = vector.extract_strided_slice %0 {offsets = [0, 240], sizes = [2, 16], strides = [1, 1]} : vector<2x256xf32> to vector<2x16xf32>
    %149 = tpu.concatenate %148, %148 in 1 : vector<2x16xf32>, vector<2x16xf32> -> vector<2x32xf32>
    %c0_36 = arith.constant 0 : index
    %c480 = arith.constant 480 : index
    %150 = vector.load %arg3[%c0_36, %c480] : memref<2x512xf32, #tpu.memory_space<vmem>>, vector<2x32xf32>
    tpu.vector_store %arg3[%c0_36, %c480], %149 {strides = array<i32>} : memref<2x512xf32, #tpu.memory_space<vmem>>, vector<2x32xf32>,
    return
  }
  func.func @transform_0(%arg0: i32) -> (i32, i32) {
    %c0_i32 = arith.constant 0 : i32
    %c0_i32_0 = arith.constant 0 : i32
    %c0_i32_1 = arith.constant 0 : i32
    return %c0_i32, %c0_i32_0 : i32, i32
  }
  func.func @transform_1(%arg0: i32) -> (i32, i32) {
    %c0_i32 = arith.constant 0 : i32
    %c0_i32_0 = arith.constant 0 : i32
    return %arg0, %c0_i32 : i32, i32
  }
  func.func @transform_2(%arg0: i32) -> (i32, i32) {
    %c0_i32 = arith.constant 0 : i32
    %c0_i32_0 = arith.constant 0 : i32
    return %arg0, %c0_i32 : i32, i32
  }
}

</mosaic_0001>

<llo_original>
// kernel: tpu_custom_call.1
$region0: #{tpu_custom_call.1}
  #allocation0 [shape = 'u32[]', space=smem, size = 0x4, offset = 0x4, fixed_abs, tag = 'smem constant byte address 0x4 - core index']
  #allocation1 [shape = 'u32[72,128]{1,0:T(1,128)}', space=vmem, size = 0x9000, scoped, tag = 'internal scratch']
  #allocation2 [shape = 'f32[1,1]{1,0:T(1,128)S(6)}', space=smem, size = 0x200, scoped, tag = 'scoped memory for tpu_custom_call.1']
  %s0 = inlined_call_operand.<no memory space> [shape: f32[1,1], index: 0, kind: input, shape index: {}]
  %s1 = inlined_call_operand.hbm [shape: f32[2,256], index: 1, kind: input, shape index: {}]
  %s2 = inlined_call_operand.hbm [shape: f32[2,512], index: 2, kind: output, shape index: {}]
  %s3 = sld [smem:[#allocation0]]
  $region22: #{tpu_custom_call.1} parent=0
    _
  %s5 = ssub.s32 1, %s3
  %s6 = scalar_select 0, %s5, %s3
  %7 = sst [smem:[#allocation2]] %s0
  $region1: #{tpu_custom_call.1} parent=0
    #allocation3 [shape = 'u8[2048]{0}', space=vmem, size = 0x800, scoped, tag = 'input window, operand 1, single buffered']
    #allocation4 [shape = 's32[1]{0}', space=sflag, size = 0x4, scoped, tag = 'scoped memory for tpu_custom_call.1']
    #allocation5 [shape = 's32[1]{0}', space=sflag, size = 0x4, scoped, tag = 'scoped memory for tpu_custom_call.1']
    #allocation6 [shape = 'u8[4096]{0}', space=vmem, size = 0x1000, scoped, tag = 'output window, operand 0, single buffered']
    %8 = vsyncpa [#allocation4], 0
    %9 = vsyncpa [#allocation5], 0
    // Predicated region
    $region2: #{tpu_custom_call.1} parent=1 // pred_check
      _
    $region3: #{tpu_custom_call.1} parent=1 // pred_check_branch
      %11 = sbr.rel (0) target = $region5
    $region4: #{tpu_custom_call.1} parent=1 // pred_region
      _
    $region5: #{tpu_custom_call.1} parent=1 // pred_fallthru
      _
    // Predicated region
    $region6: #{tpu_custom_call.1} parent=1 // pred_check
      _
    $region7: #{tpu_custom_call.1} parent=1 // pred_check_branch
      %13 = sbr.rel (0) target = $region9
    $region8: #{tpu_custom_call.1} parent=1 // pred_region
      %15 = vsyncadd [#allocation4], 0
      %s17 = sshll.u32 %s1, 4
      %s18 = int_to_ptr.hbm [resolvable:$true] %s17
      %s19 = sshll.u32 [#allocation3], 4
      %s20 = int_to_ptr.vmem [resolvable:$true] %s19
      %22 = dma.hbm_to_vmem [thread:$0]  %s18, 64, %s20, [#allocation4]
    $region9: #{tpu_custom_call.1} parent=1 // pred_fallthru
      _
    // Predicated region
    $region10: #{tpu_custom_call.1} parent=1 // pred_check
      _
    $region11: #{tpu_custom_call.1} parent=1 // pred_check_branch
      %24 = sbr.rel (0) target = $region13
    $region12: #{tpu_custom_call.1} parent=1 // pred_region
      %26 = dma.done [#allocation4], 64
    $region13: #{tpu_custom_call.1} parent=1 // pred_fallthru
      _
    %v27 = vld [vmem:[#allocation3] sm:$0xf]
    %s28 = sld [smem:[#allocation2]]
    %v29 = vstv %s28
    %v30 = vsub.f32 %v27, %v29
    %v31 = vmul.f32 %v30, 1.442695
    %v32 = vpow.pop %v31
    %v33 = vadd.f32 %v32, 1.0
    %v34 = vrcp.pop %v33
    %v35 = vmul.f32 %v33, %v34
    %v36 = vsub.f32 1.0, %v35
    %v37 = vmul.f32 %v34, %v36
    %v38 = vadd.f32 %v34, %v37
    %vm39 = vweird.f32 %v33
    %vm40 = vweird.f32 %v34
    %vm41 = vmor %vm39, %vm40
    %v42 = vsel %vm41, %v34, %v38
    %v43 = vand.u32 2147483647, %v33
    %vm44 = vcmp.eq.f32.partialorder %v43, 8.507059e+37
    %v45 = vand.u32 %v33, 2147483648
    %v46 = vor.u32 1.1754944e-38, %v45
    %v47 = vsel %vm44, %v46, %v42
    %v48 = vmul.f32 2.0, %v47
    %vm49 = vcmp.eq.f32.partialorder %v27, 0.0
    %v50 = vsel %vm49, 0.0, %v48
    %v51 = vmul.f32 %v27, %v50
    %v52 = vlaneseq
    %v53 = vand.u32 %v52, 127
    %v54 = vadd.s32 %v53, 128
    %vm55 = vcmp.lt.s32.totalorder %v53, 0
    %v56 = vsub.s32 0, %v53
    %v57 = vsel %vm55, %v56, %v53
    %v58 = vshrl.u32 %v57, 4
    %v59 = vand.u32 %v57, 15
    %v60 = vsub.s32 0, %v59
    %v61 = vsel %vm55, %v60, %v59
    %vm62 = vcmp.lt.s32.totalorder %v54, 0
    %v63 = vsub.s32 0, %v54
    %v64 = vsel %vm62, %v63, %v54
    %v65 = vshrl.u32 %v64, 4
    %v66 = vand.u32 %v64, 15
    %v67 = vsub.s32 0, %v66
    %v68 = vsel %vm62, %v67, %v66
    %vm69 = vcmp.ne.s32.totalorder %v61, 0
    %vm70 = vcmp.ne.s32.totalorder %v68, 0
    %vm71 = vcmp.lt.s32.totalorder %v61, 0
    %vm72 = vcmp.lt.s32.totalorder %v68, 0
    %vm73 = vmand %vm71, %vm69
    %vm74 = vmand %vm72, %vm70
    %v75 = vadd.s32 %v61, 16
    %v76 = vadd.s32 %v68, 16
    %v77 = vsel %vm73, %v75, %v61
    %v78 = vsel %vm74, %v76, %v68
    %vm79 = vcmp.ne.s32.totalorder %v77, 0
    %vm80 = vcmp.ne.s32.totalorder %v78, 0
    %vm81 = vcmp.ne.s32.totalorder %v77, 15
    %vm82 = vcmp.ne.s32.totalorder %v78, 15
    %84 = vst [vmem:[#allocation1] ss:$4 sm:$0xff] %v50
    %v85 = vld.sshfl [vmem:[#allocation1 + $0x8] sm:$0xff pattern:$0x73625140]
    %86 = vrot.lane.b32.xlu0 %v85, 1
    %v87 = vpop.permute.xlu0 %86
    %89 = vst [vmem:[#allocation1] ss:$4 sm:$0xff] %v50
    %v90 = vld.sshfl [vmem:[#allocation1] sm:$0xff pattern:$0x73625140]
    %v91 = vld.sshfl [vmem:[#allocation1 + $0x8] sm:$0xff pattern:$0x73625140]
    %92 = vrot.lane.b32.xlu0 %v90, 1
    %v93 = vpop.permute.xlu0 %92
    %94 = vrot.lane.b32.xlu0 %v91, 1
    %v95 = vpop.permute.xlu0 %94
    %vm96 = vcmask 7168
    %v97 = vsel %vm96, %v93, %v95
    %v100 = vsel %vm96, %v87, %v93
    %v101 = vsel %vm79, 1, 0
    %v102 = vsel %vm80, 1, 0
    %vm103 = vcmp.eq.s32.totalorder %v101, 1
    %vm104 = vcmp.eq.s32.totalorder %v102, 1
    %v105 = vsel %vm103, %v100, 0.0
    %v106 = vsel %vm104, %v97, 0.0
    %108 = vst [vmem:[#allocation1] ss:$4 sm:$0xff] %v51
    %v109 = vld.sshfl [vmem:[#allocation1 + $0x8] sm:$0xff pattern:$0x73625140]
    %110 = vrot.lane.b32.xlu0 %v109, 1
    %v111 = vpop.permute.xlu0 %110
    %113 = vst [vmem:[#allocation1] ss:$4 sm:$0xff] %v51
    %v114 = vld.sshfl [vmem:[#allocation1] sm:$0xff pattern:$0x73625140]
    %v115 = vld.sshfl [vmem:[#allocation1 + $0x8] sm:$0xff pattern:$0x73625140]
    %116 = vrot.lane.b32.xlu0 %v114, 1
    %v117 = vpop.permute.xlu0 %116
    %118 = vrot.lane.b32.xlu0 %v115, 1
    %v119 = vpop.permute.xlu0 %118
    %v120 = vsel %vm96, %v117, %v119
    %v123 = vsel %vm96, %v111, %v117
    %v124 = vsel %vm103, %v123, 0.0
    %v125 = vsel %vm104, %v120, 0.0
    %126 = vst [vmem:[#allocation1] ss:$4 sm:$0xff] %v50
    %v127 = vld.sshfl [vmem:[#allocation1] sm:$0xff pattern:$0x73625140]
    %v128 = vld.sshfl [vmem:[#allocation1 + $0x8] sm:$0xff pattern:$0x73625140]
    %129 = vrot.lane.b32.xlu0 %v127, 127
    %v130 = vpop.permute.xlu0 %129
    %131 = vrot.lane.b32.xlu0 %v128, 127
    %v132 = vpop.permute.xlu0 %131
    %vm133 = vcmask 1039360
    %v134 = vsel %vm133, %v130, %v132
    %137 = vst [vmem:[#allocation1] ss:$4 sm:$0xff] %v50
    %v138 = vld.sshfl [vmem:[#allocation1] sm:$0xff pattern:$0x73625140]
    %139 = vrot.lane.b32.xlu0 %v138, 127
    %v140 = vpop.permute.xlu0 %139
    %v142 = vsel %vm133, %v132, %v140
    %v143 = vsel %vm81, 1, 0
    %v144 = vsel %vm82, 1, 0
    %vm145 = vcmp.eq.s32.totalorder %v143, 1
    %vm146 = vcmp.eq.s32.totalorder %v144, 1
    %v147 = vsel %vm145, %v134, 0.0
    %v148 = vsel %vm146, %v142, 0.0
    %149 = vst [vmem:[#allocation1] ss:$4 sm:$0xff] %v51
    %v150 = vld.sshfl [vmem:[#allocation1] sm:$0xff pattern:$0x73625140]
    %v151 = vld.sshfl [vmem:[#allocation1 + $0x8] sm:$0xff pattern:$0x73625140]
    %152 = vrot.lane.b32.xlu0 %v150, 127
    %v153 = vpop.permute.xlu0 %152
    %154 = vrot.lane.b32.xlu0 %v151, 127
    %v155 = vpop.permute.xlu0 %154
    %v156 = vsel %vm133, %v153, %v155
    %159 = vst [vmem:[#allocation1] ss:$4 sm:$0xff] %v51
    %v160 = vld.sshfl [vmem:[#allocation1] sm:$0xff pattern:$0x73625140]
    %161 = vrot.lane.b32.xlu0 %v160, 127
    %v162 = vpop.permute.xlu0 %161
    %v164 = vsel %vm133, %v155, %v162
    %v165 = vsel %vm145, %v156, 0.0
    %v166 = vsel %vm146, %v164, 0.0
    %v167 = vadd.f32 %v124, %v165
    %v168 = vadd.f32 %v125, %v166
    %v169 = vmul.f32 %v167, 0.4930687
    %v170 = vmul.f32 %v168, 0.4930687
    %v171 = vmul.f32 %v51, 0.60653067
    %173 = vst [vmem:[#allocation1] ss:$4 sm:$0xff] %v171
    %v174 = vld.sshfl [vmem:[#allocation1] sm:$0xff pattern:$0x73625140]
    %v175 = vld.sshfl [vmem:[#allocation1 + $0x8] sm:$0xff pattern:$0x73625140]
    %v178 = vadd.f32 %v169, %v174
    %v179 = vadd.f32 %v170, %v175
    %v180 = vadd.f32 %v105, %v147
    %v181 = vadd.f32 %v106, %v148
    %v182 = vmul.f32 %v180, 0.4930687
    %v183 = vmul.f32 %v181, 0.4930687
    %v184 = vmul.f32 %v50, 0.60653067
    %186 = vst [vmem:[#allocation1] ss:$4 sm:$0xff] %v184
    %v187 = vld.sshfl [vmem:[#allocation1] sm:$0xff pattern:$0x73625140]
    %v188 = vld.sshfl [vmem:[#allocation1 + $0x8] sm:$0xff pattern:$0x73625140]
    %v191 = vadd.f32 %v182, %v187
    %v192 = vadd.f32 %v183, %v188
    %195 = vrot.lane.b32.xlu0 %v178, 112
    %v196 = vpop.permute.xlu0 %195
    %197 = vrot.lane.b32.xlu0 %v179, 112
    %v198 = vpop.permute.xlu0 %197
    %vm199 = vcmask 916480
    %v200 = vsel %vm199, %v196, %v198
    %v204 = vsel %vm199, %v198, %v196
    %v205 = vadd.f32 %v178, %v200
    %v206 = vadd.f32 %v179, %v204
    %209 = vrot.lane.b32.xlu0 %v191, 112
    %v210 = vpop.permute.xlu0 %209
    %211 = vrot.lane.b32.xlu0 %v192, 112
    %v212 = vpop.permute.xlu0 %211
    %v213 = vsel %vm199, %v210, %v212
    %v217 = vsel %vm199, %v212, %v210
    %v218 = vadd.f32 %v191, %v213
    %v219 = vadd.f32 %v192, %v217
    %vm220 = vcmp.eq.f32.partialorder %v218, 0.0
    %vm221 = vcmp.eq.f32.partialorder %v219, 0.0
    %v222 = vsel %vm220, 1.0, %v218
    %v223 = vsel %vm221, 1.0, %v219
    %v224 = vrcp.pop %v222
    %v225 = vmul.f32 %v222, %v224
    %v226 = vsub.f32 1.0, %v225
    %v227 = vmul.f32 %v224, %v226
    %v228 = vadd.f32 %v224, %v227
    %vm229 = vweird.f32 %v222
    %vm230 = vweird.f32 %v224
    %vm231 = vmor %vm229, %vm230
    %v232 = vsel %vm231, %v224, %v228
    %v233 = vand.u32 2147483647, %v222
    %vm234 = vcmp.eq.f32.partialorder %v233, 8.507059e+37
    %v235 = vand.u32 %v222, 2147483648
    %v236 = vor.u32 1.1754944e-38, %v235
    %v237 = vsel %vm234, %v236, %v232
    %v238 = vmul.f32 %v205, %v237
    %v239 = vrcp.pop %v223
    %v240 = vmul.f32 %v223, %v239
    %v241 = vsub.f32 1.0, %v240
    %v242 = vmul.f32 %v239, %v241
    %v243 = vadd.f32 %v239, %v242
    %vm244 = vweird.f32 %v223
    %vm245 = vweird.f32 %v239
    %vm246 = vmor %vm244, %vm245
    %v247 = vsel %vm246, %v239, %v243
    %v248 = vand.u32 2147483647, %v223
    %vm249 = vcmp.eq.f32.partialorder %v248, 8.507059e+37
    %v250 = vand.u32 %v223, 2147483648
    %v251 = vor.u32 1.1754944e-38, %v250
    %v252 = vsel %vm249, %v251, %v247
    %v253 = vmul.f32 %v206, %v252
    %255 = vrot.lane.b32.xlu0 %v238, 16
    %v256 = vpop.permute.xlu0 %255
    %vm258 = vcmask 130048
    %v259 = vsel %vm258, %v27, %v256
    %vm260 = vcmask 254976
    %261 = vst.msk [vmem:[#allocation6] sm:$0x3] %vm260, %v259
    %263 = vst [vmem:[#allocation1] ss:$4 sm:$0xff] %v27
    %v264 = vld.sshfl [vmem:[#allocation1] sm:$0xff pattern:$0x73625140]
    %265 = vrot.lane.b32.xlu0 %v264, 112
    %v266 = vpop.permute.xlu0 %265
    %v268 = vsel %vm258, %v266, %v238
    %270 = vrot.lane.b32.xlu0 %v268, 32
    %v271 = vpop.permute.xlu0 %270
    %vm273 = vcmask 517376
    %274 = vst.msk [vmem:[#allocation6] sm:$0x3] %vm273, %v271
    %275 = vst [vmem:[#allocation1] ss:$4 sm:$0xff] %v27
    %v276 = vld.sshfl [vmem:[#allocation1] sm:$0xff pattern:$0x73625140]
    %277 = vrot.lane.b32.xlu0 %v276, 96
    %v278 = vpop.permute.xlu0 %277
    %280 = vrot.lane.b32.xlu0 %v238, 112
    %v281 = vpop.permute.xlu0 %280
    %v283 = vsel %vm258, %v278, %v281
    %285 = vrot.lane.b32.xlu0 %v283, 64
    %v286 = vpop.permute.xlu0 %285
    %vm288 = vcmask 779776
    %289 = vst.msk [vmem:[#allocation6] sm:$0x3] %vm288, %v286
    %290 = vst [vmem:[#allocation1] ss:$4 sm:$0xff] %v27
    %v291 = vld.sshfl [vmem:[#allocation1] sm:$0xff pattern:$0x73625140]
    %292 = vrot.lane.b32.xlu0 %v291, 80
    %v293 = vpop.permute.xlu0 %292
    %295 = vrot.lane.b32.xlu0 %v238, 96
    %v296 = vpop.permute.xlu0 %295
    %v298 = vsel %vm258, %v293, %v296
    %300 = vrot.lane.b32.xlu0 %v298, 96
    %v301 = vpop.permute.xlu0 %300
    %vm303 = vcmask 1042176
    %304 = vst.msk [vmem:[#allocation6] sm:$0x3] %vm303, %v301
    %305 = vst [vmem:[#allocation1] ss:$4 sm:$0xff] %v27
    %v306 = vld.sshfl [vmem:[#allocation1] sm:$0xff pattern:$0x73625140]
    %307 = vrot.lane.b32.xlu0 %v306, 64
    %v308 = vpop.permute.xlu0 %307
    %310 = vrot.lane.b32.xlu0 %v238, 80
    %v311 = vpop.permute.xlu0 %310
    %v313 = vsel %vm258, %v308, %v311
    %314 = vst.msk [vmem:[#allocation6 + $0x2] sm:$0x3] %vm260, %v313
    %315 = vst [vmem:[#allocation1] ss:$4 sm:$0xff] %v27
    %v316 = vld.sshfl [vmem:[#allocation1] sm:$0xff pattern:$0x73625140]
    %317 = vrot.lane.b32.xlu0 %v316, 48
    %v318 = vpop.permute.xlu0 %317
    %320 = vrot.lane.b32.xlu0 %v238, 64
    %v321 = vpop.permute.xlu0 %320
    %v323 = vsel %vm258, %v318, %v321
    %325 = vrot.lane.b32.xlu0 %v323, 32
    %v326 = vpop.permute.xlu0 %325
    %328 = vst.msk [vmem:[#allocation6 + $0x2] sm:$0x3] %vm273, %v326
    %329 = vst [vmem:[#allocation1] ss:$4 sm:$0xff] %v27
    %v330 = vld.sshfl [vmem:[#allocation1] sm:$0xff pattern:$0x73625140]
    %331 = vrot.lane.b32.xlu0 %v330, 32
    %v332 = vpop.permute.xlu0 %331
    %334 = vrot.lane.b32.xlu0 %v238, 48
    %v335 = vpop.permute.xlu0 %334
    %v337 = vsel %vm258, %v332, %v335
    %339 = vrot.lane.b32.xlu0 %v337, 64
    %v340 = vpop.permute.xlu0 %339
    %342 = vst.msk [vmem:[#allocation6 + $0x2] sm:$0x3] %vm288, %v340
    %343 = vst [vmem:[#allocation1] ss:$4 sm:$0xff] %v27
    %v344 = vld.sshfl [vmem:[#allocation1] sm:$0xff pattern:$0x73625140]
    %345 = vrot.lane.b32.xlu0 %v344, 16
    %v346 = vpop.permute.xlu0 %345
    %348 = vrot.lane.b32.xlu0 %v238, 32
    %v349 = vpop.permute.xlu0 %348
    %v351 = vsel %vm258, %v346, %v349
    %353 = vrot.lane.b32.xlu0 %v351, 96
    %v354 = vpop.permute.xlu0 %353
    %356 = vst.msk [vmem:[#allocation6 + $0x2] sm:$0x3] %vm303, %v354
    %357 = vst [vmem:[#allocation1] ss:$4 sm:$0xff] %v27
    %v358 = vld.sshfl [vmem:[#allocation1 + $0x8] sm:$0xff pattern:$0x73625140]
    %361 = vrot.lane.b32.xlu0 %v253, 16
    %v362 = vpop.permute.xlu0 %361
    %v364 = vsel %vm258, %v358, %v362
    %365 = vst.msk [vmem:[#allocation6 + $0x4] sm:$0x3] %vm260, %v364
    %366 = vst [vmem:[#allocation1] ss:$4 sm:$0xff] %v27
    %v367 = vld.sshfl [vmem:[#allocation1 + $0x8] sm:$0xff pattern:$0x73625140]
    %368 = vrot.lane.b32.xlu0 %v367, 112
    %v369 = vpop.permute.xlu0 %368
    %v371 = vsel %vm258, %v369, %v253
    %373 = vrot.lane.b32.xlu0 %v371, 32
    %v374 = vpop.permute.xlu0 %373
    %376 = vst.msk [vmem:[#allocation6 + $0x4] sm:$0x3] %vm273, %v374
    %377 = vst [vmem:[#allocation1] ss:$4 sm:$0xff] %v27
    %v378 = vld.sshfl [vmem:[#allocation1 + $0x8] sm:$0xff pattern:$0x73625140]
    %379 = vrot.lane.b32.xlu0 %v378, 96
    %v380 = vpop.permute.xlu0 %379
    %382 = vrot.lane.b32.xlu0 %v253, 112
    %v383 = vpop.permute.xlu0 %382
    %v385 = vsel %vm258, %v380, %v383
    %387 = vrot.lane.b32.xlu0 %v385, 64
    %v388 = vpop.permute.xlu0 %387
    %390 = vst.msk [vmem:[#allocation6 + $0x4] sm:$0x3] %vm288, %v388
    %391 = vst [vmem:[#allocation1] ss:$4 sm:$0xff] %v27
    %v392 = vld.sshfl [vmem:[#allocation1 + $0x8] sm:$0xff pattern:$0x73625140]
    %393 = vrot.lane.b32.xlu0 %v392, 80
    %v394 = vpop.permute.xlu0 %393
    %396 = vrot.lane.b32.xlu0 %v253, 96
    %v397 = vpop.permute.xlu0 %396
    %v399 = vsel %vm258, %v394, %v397
    %401 = vrot.lane.b32.xlu0 %v399, 96
    %v402 = vpop.permute.xlu0 %401
    %404 = vst.msk [vmem:[#allocation6 + $0x4] sm:$0x3] %vm303, %v402
    %405 = vst [vmem:[#allocation1] ss:$4 sm:$0xff] %v27
    %v406 = vld.sshfl [vmem:[#allocation1 + $0x8] sm:$0xff pattern:$0x73625140]
    %407 = vrot.lane.b32.xlu0 %v406, 64
    %v408 = vpop.permute.xlu0 %407
    %410 = vrot.lane.b32.xlu0 %v253, 80
    %v411 = vpop.permute.xlu0 %410
    %v413 = vsel %vm258, %v408, %v411
    %414 = vst.msk [vmem:[#allocation6 + $0x6] sm:$0x3] %vm260, %v413
    %415 = vst [vmem:[#allocation1] ss:$4 sm:$0xff] %v27
    %v416 = vld.sshfl [vmem:[#allocation1 + $0x8] sm:$0xff pattern:$0x73625140]
    %417 = vrot.lane.b32.xlu0 %v416, 48
    %v418 = vpop.permute.xlu0 %417
    %420 = vrot.lane.b32.xlu0 %v253, 64
    %v421 = vpop.permute.xlu0 %420
    %v423 = vsel %vm258, %v418, %v421
    %425 = vrot.lane.b32.xlu0 %v423, 32
    %v426 = vpop.permute.xlu0 %425
    %428 = vst.msk [vmem:[#allocation6 + $0x6] sm:$0x3] %vm273, %v426
    %429 = vst [vmem:[#allocation1] ss:$4 sm:$0xff] %v27
    %v430 = vld.sshfl [vmem:[#allocation1 + $0x8] sm:$0xff pattern:$0x73625140]
    %431 = vrot.lane.b32.xlu0 %v430, 32
    %v432 = vpop.permute.xlu0 %431
    %434 = vrot.lane.b32.xlu0 %v253, 48
    %v435 = vpop.permute.xlu0 %434
    %v437 = vsel %vm258, %v432, %v435
    %439 = vrot.lane.b32.xlu0 %v437, 64
    %v440 = vpop.permute.xlu0 %439
    %442 = vst.msk [vmem:[#allocation6 + $0x6] sm:$0x3] %vm288, %v440
    %443 = vst [vmem:[#allocation1] ss:$4 sm:$0xff] %v27
    %v444 = vld.sshfl [vmem:[#allocation1 + $0x8] sm:$0xff pattern:$0x73625140]
    %445 = vrot.lane.b32.xlu0 %v444, 16
    %v446 = vpop.permute.xlu0 %445
    %448 = vst [vmem:[#allocation1] ss:$4 sm:$0xff] %v27
    %v449 = vld.sshfl [vmem:[#allocation1 + $0x8] sm:$0xff pattern:$0x73625140]
    %450 = vrot.lane.b32.xlu0 %v449, 32
    %v451 = vpop.permute.xlu0 %450
    %v453 = vsel %vm258, %v446, %v451
    %455 = vrot.lane.b32.xlu0 %v453, 96
    %v456 = vpop.permute.xlu0 %455
    %458 = vst.msk [vmem:[#allocation6 + $0x6] sm:$0x3] %vm303, %v456
    // Predicated region
    $region14: #{tpu_custom_call.1} parent=1 // pred_check
      _
    $region15: #{tpu_custom_call.1} parent=1 // pred_check_branch
      %460 = sbr.rel (0) target = $region17
    $region16: #{tpu_custom_call.1} parent=1 // pred_region
      %462 = vsyncadd [#allocation5], 0
      %s464 = sshll.u32 [#allocation6], 4
      %s465 = int_to_ptr.vmem [resolvable:$true] %s464
      %s466 = sshll.u32 %s2, 4
      %s467 = int_to_ptr.hbm [resolvable:$true] %s466
      %469 = dma.vmem_to_hbm [thread:$0]  %s465, 128, %s467, [#allocation5]
    $region17: #{tpu_custom_call.1} parent=1 // pred_fallthru
      _
    // Predicated region
    $region18: #{tpu_custom_call.1} parent=1 // pred_check
      _
    $region19: #{tpu_custom_call.1} parent=1 // pred_check_branch
      %471 = sbr.rel (0) target = $region21
    $region20: #{tpu_custom_call.1} parent=1 // pred_region
      %473 = dma.done [#allocation5], 128
    $region21: #{tpu_custom_call.1} parent=1 // pred_fallthru
      _
    %474 = vsyncpa [#allocation4], 1
    %475 = vsyncpa [#allocation5], 1

</llo_original>
